<compile_context>
chip_gen: v5e
topology: v5e:2x2
jax: 0.10.0
libtpu: 0.0.40
codegen_flags: <defaults>
</compile_context>

<pallas_src>
import jax
import jax.numpy as jnp
from jax.experimental import pallas as pl
from jax.experimental.pallas import tpu as pltpu

LANE = 128
SUBLANE_BF16 = 16  # bf16 packs 16 sublanes per vreg


def _round_up(x, m):
    return ((x + m - 1) // m) * m


def _mlp_kernel(x_ref, w1_ref, b1_ref, w2_ref, b2_ref, w3_ref, b3_ref, o_ref):
    # In-kernel f32 -> bf16 cast of the activations (VPU slot is free; halves
    # x HBM traffic vs a host-side pre-cast).
    xb = x_ref[...].astype(jnp.bfloat16)
    # Layer 1: bf16 MXU matmul, f32 accumulate; bias + ReLU in f32 on the VPU.
    h1 = jnp.dot(xb, w1_ref[...], preferred_element_type=jnp.float32)
    h1 = jnp.maximum(h1 + b1_ref[...], 0.0)
    # Layer 2.
    h2 = jnp.dot(h1.astype(jnp.bfloat16), w2_ref[...],
                 preferred_element_type=jnp.float32)
    h2 = jnp.maximum(h2 + b2_ref[...], 0.0)
    # Layer 3: logits, no activation; store (possibly bf16) lane-dense.
    out = jnp.dot(h2.astype(jnp.bfloat16), w3_ref[...],
                  preferred_element_type=jnp.float32)
    o_ref[...] = (out + b3_ref[...]).astype(o_ref.dtype)


def prepare_params(params):
    """One-time parameter prep (call once, reuse every forward step).

    Pads hidden/output widths to multiples of 128 lanes (zeros => identical
    math) and casts weights to bf16 for the MXU; biases stay f32.
    """
    w1, b1 = params["w1"], params["b1"]
    w2, b2 = params["w2"], params["b2"]
    w3, b3 = params["w3"], params["b3"]
    d_in, h1 = w1.shape
    h2 = w2.shape[1]
    labels = w3.shape[1]
    h1p = _round_up(h1, LANE)
    h2p = _round_up(h2, LANE)
    lp = _round_up(labels, LANE)
    return {
        "w1": jnp.pad(w1, ((0, 0), (0, h1p - h1))).astype(jnp.bfloat16),
        "b1": jnp.pad(b1.reshape(1, -1), ((0, 0), (0, h1p - h1))).astype(jnp.float32),
        "w2": jnp.pad(w2, ((0, h1p - h1), (0, h2p - h2))).astype(jnp.bfloat16),
        "b2": jnp.pad(b2.reshape(1, -1), ((0, 0), (0, h2p - h2))).astype(jnp.float32),
        "w3": jnp.pad(w3, ((0, h2p - h2), (0, lp - labels))).astype(jnp.bfloat16),
        "b3": jnp.pad(b3.reshape(1, -1), ((0, 0), (0, lp - labels))).astype(jnp.float32),
        "dims": (d_in, h1, h2, labels, h1p, h2p, lp),
    }


def label_predictor_forward(x, prep, *, block_m=1024, out_dtype=jnp.bfloat16):
    """x: (B, ...) feature map, flattened row-major like PyTorch .view(B, -1).
    prep: output of prepare_params (pre-padded / pre-cast weights)."""
    if x.ndim > 2:
        x = x.reshape(x.shape[0], -1)
    if x.dtype != jnp.float32:
        x = x.astype(jnp.float32)
    B, d_in = x.shape
    d_in_p, h1, h2, labels, h1p, h2p, lp = prep["dims"]
    assert d_in == d_in_p, f"feature dim {d_in} != prepared {d_in_p}"

    # Batch tiling: large tiles amortize the ~0.35us/step pipeline overhead,
    # but cap at ~half the padded batch so the grid keeps >= 2 steps and the
    # "parallel" axis can shard across v7x's two TensorCores. Multiple of 16
    # for bf16 sublane packing.
    bp0 = _round_up(max(B, 1), SUBLANE_BF16)
    half = _round_up((bp0 + 1) // 2, SUBLANE_BF16)
    tm = max(SUBLANE_BF16, min(_round_up(block_m, SUBLANE_BF16), half))
    bp = _round_up(B, tm)
    grid = (bp // tm,)

    xp = x if bp == B else jnp.pad(x, ((0, bp - B), (0, 0)))

    out_itemsize = jnp.dtype(out_dtype).itemsize

    # Real (unpadded) dims for the cost estimate; the kernel is memory-bound.
    flops = 2 * B * (d_in * h1 + h1 * h2 + h2 * labels)
    bytes_accessed = int(
        B * d_in * 4
        + (d_in * h1 + h1 * h2 + h2 * labels) * 2
        + (h1 + h2 + labels) * 4
        + B * labels * out_itemsize)

    # Explicit scoped-VMEM budget: double-buffered x/out tiles + resident
    # weights + headroom (keeps v5e's 16 MiB default from binding if dims grow).
    w_bytes = (prep["w1"].size + prep["w2"].size + prep["w3"].size) * 2 \
        + (prep["b1"].size + prep["b2"].size + prep["b3"].size) * 4
    tile_bytes = tm * d_in * 4 + tm * lp * out_itemsize
    vmem_limit = int(min(max(2 * (tile_bytes + w_bytes) + (4 << 20), 32 << 20),
                         100 << 20))

    out = pl.pallas_call(
        _mlp_kernel,
        out_shape=jax.ShapeDtypeStruct((bp, lp), out_dtype),
        grid_spec=pltpu.PrefetchScalarGridSpec(
            num_scalar_prefetch=0,
            grid=grid,
            in_specs=[
                pl.BlockSpec((tm, d_in), lambda i: (i, 0)),    # x: tiled over batch
                pl.BlockSpec((d_in, h1p), lambda i: (0, 0)),   # weights/biases resident
                pl.BlockSpec((1, h1p), lambda i: (0, 0)),
                pl.BlockSpec((h1p, h2p), lambda i: (0, 0)),
                pl.BlockSpec((1, h2p), lambda i: (0, 0)),
                pl.BlockSpec((h2p, lp), lambda i: (0, 0)),
                pl.BlockSpec((1, lp), lambda i: (0, 0)),
            ],
            out_specs=pl.BlockSpec((tm, lp), lambda i: (i, 0)),
        ),
        compiler_params=pltpu.CompilerParams(
            dimension_semantics=("parallel",),
            vmem_limit_bytes=vmem_limit),
        cost_estimate=pl.CostEstimate(
            flops=flops, transcendentals=0, bytes_accessed=bytes_accessed),
    )(xp, prep["w1"], prep["b1"], prep["w2"], prep["b2"], prep["w3"], prep["b3"])

    # TODO(synk): in the full DANN training loop, fuse the downstream softmax /
    # cross-entropy here so the padded logits slab never round-trips HBM.
    return out[:B, :labels]


def init_params(key, in_features, out_channel, labels_num):
    """nn.Linear-style init (uniform +/- 1/sqrt(fan_in)); weights stored as
    (in, out) == W_torch.T so the kernel computes x @ W + b."""
    def linear(k, fan_in, fan_out):
        kw, kb = jax.random.split(k)
        bound = 1.0 / jnp.sqrt(fan_in)
        w = jax.random.uniform(kw, (fan_in, fan_out), jnp.float32, -bound, bound)
        b = jax.random.uniform(kb, (fan_out,), jnp.float32, -bound, bound)
        return w, b

    k1, k2, k3 = jax.random.split(key, 3)
    w1, b1 = linear(k1, in_features, out_channel)
    w2, b2 = linear(k2, out_channel, out_channel // 2)
    w3, b3 = linear(k3, out_channel // 2, labels_num)
    return {"w1": w1, "b1": b1, "w2": w2, "b2": b2, "w3": w3, "b3": b3}


def reference_forward_f32(x, params):
    """Pure-JAX f32 reference (matches PyTorch semantics)."""
    B = x.shape[0]
    x = x.reshape(B, -1)
    h = jnp.maximum(x @ params["w1"] + params["b1"], 0.0)
    h = jnp.maximum(h @ params["w2"] + params["b2"], 0.0)
    return h @ params["w3"] + params["b3"]


def reference_forward_bf16(x, params):
    """Pure-JAX reference with the same bf16-matmul / f32-accumulate recipe."""
    B = x.shape[0]
    xb = x.reshape(B, -1).astype(jnp.bfloat16)
    w1 = params["w1"].astype(jnp.bfloat16)
    w2 = params["w2"].astype(jnp.bfloat16)
    w3 = params["w3"].astype(jnp.bfloat16)
    h = jnp.dot(xb, w1, preferred_element_type=jnp.float32) + params["b1"]
    h = jnp.maximum(h, 0.0)
    h = jnp.dot(h.astype(jnp.bfloat16), w2,
                preferred_element_type=jnp.float32) + params["b2"]
    h = jnp.maximum(h, 0.0)
    return jnp.dot(h.astype(jnp.bfloat16), w3,
                   preferred_element_type=jnp.float32) + params["b3"]


if __name__ == "__main__":
    # Small shapes consistent with the module structure:
    # in_channel=4, in_dim=4 -> in_features=64; out_channel=32; labels_num=10.
    # batch=40 exercises the batch grid (2 tiles of 32 rows) and ragged padding.
    batch, in_channel, in_dim = 40, 4, 4
    out_channel, labels_num = 32, 10
    in_features = in_channel * in_dim * in_dim

    key = jax.random.PRNGKey(0)
    kx, kp = jax.random.split(key)
    x = jax.random.normal(kx, (batch, in_channel, in_dim, in_dim), jnp.float32)
    params = init_params(kp, in_features, out_channel, labels_num)
    prep = prepare_params(params)      # one-time weight prep (hoisted out of fwd)

    y = label_predictor_forward(x, prep)
    y = jax.block_until_ready(y)

    y_f32 = y.astype(jnp.float32)
    y_ref16 = reference_forward_bf16(x, params)
    y_ref32 = reference_forward_f32(x, params)
    assert y.shape == (batch, labels_num)
    # Output is stored as bf16 (f32 accumulate in-kernel), so tolerances account
    # for one bf16 rounding on top of the bf16-matmul recipe.
    assert jnp.allclose(y_f32, y_ref16, atol=2e-2, rtol=2e-2), "mismatch vs bf16 reference"
    assert jnp.allclose(y_f32, y_ref32, atol=6e-2, rtol=6e-2), "mismatch vs f32 reference"

    print("KERNEL_OK")
</pallas_src>

<mosaic_0001>
module attributes {stable_mosaic.version = 11 : i64} {
  func.func @_mlp_kernel(%arg0: i32, %arg1: memref<32x64xf32, #tpu.memory_space<vmem>>, %arg2: memref<64x128xbf16, #tpu.memory_space<vmem>>, %arg3: memref<1x128xf32, #tpu.memory_space<vmem>>, %arg4: memref<128x128xbf16, #tpu.memory_space<vmem>>, %arg5: memref<1x128xf32, #tpu.memory_space<vmem>>, %arg6: memref<128x128xbf16, #tpu.memory_space<vmem>>, %arg7: memref<1x128xf32, #tpu.memory_space<vmem>>, %arg8: memref<32x128xbf16, #tpu.memory_space<vmem>>) attributes {dimension_semantics = [#tpu.dimension_semantics<parallel>], iteration_bounds = array<i64: 2>, scalar_prefetch = 0 : i64, scratch_operands = 0 : i64, tpu.core_type = #tpu.core_type<tc>, window_params = [{transform_indices = @transform_0, window_bounds = array<i64: 32, 64>}, {pipeline_mode = #tpu.pipeline_mode<synchronous>, transform_indices = @transform_1, window_bounds = array<i64: 64, 128>}, {pipeline_mode = #tpu.pipeline_mode<synchronous>, transform_indices = @transform_2, window_bounds = array<i64: 1, 128>}, {pipeline_mode = #tpu.pipeline_mode<synchronous>, transform_indices = @transform_3, window_bounds = array<i64: 128, 128>}, {pipeline_mode = #tpu.pipeline_mode<synchronous>, transform_indices = @transform_4, window_bounds = array<i64: 1, 128>}, {pipeline_mode = #tpu.pipeline_mode<synchronous>, transform_indices = @transform_5, window_bounds = array<i64: 128, 128>}, {pipeline_mode = #tpu.pipeline_mode<synchronous>, transform_indices = @transform_6, window_bounds = array<i64: 1, 128>}, {transform_indices = @transform_7, window_bounds = array<i64: 32, 128>}]} {
    %c0 = arith.constant 0 : index
    %c0_0 = arith.constant 0 : index
    %0 = vector.load %arg1[%c0, %c0_0] : memref<32x64xf32, #tpu.memory_space<vmem>>, vector<32x64xf32>
    %1 = arith.truncf %0 : vector<32x64xf32> to vector<32x64xbf16>
    %c0_1 = arith.constant 0 : index
    %c0_2 = arith.constant 0 : index
    %2 = vector.load %arg2[%c0_1, %c0_2] : memref<64x128xbf16, #tpu.memory_space<vmem>>, vector<64x128xbf16>
    %cst = arith.constant dense<0.000000e+00> : vector<32x128xf32>
    %3 = tpu.matmul %1, %2, %cst {dimension_numbers = #tpu.dot_dimension_numbers<[1], [0], [0], [1], [0, 0, 1, 1], [], []>} : vector<32x64xbf16>, vector<64x128xbf16>, vector<32x128xf32> -> vector<32x128xf32>
    %c0_3 = arith.constant 0 : index
    %c0_4 = arith.constant 0 : index
    %4 = vector.load %arg3[%c0_3, %c0_4] : memref<1x128xf32, #tpu.memory_space<vmem>>, vector<1x128xf32>
    %5 = vector.broadcast %4 : vector<1x128xf32> to vector<32x128xf32>
    %6 = arith.addf %3, %5 : vector<32x128xf32>
    %cst_5 = arith.constant 0.000000e+00 : f32
    %7 = vector.broadcast %cst_5 : f32 to vector<32x128xf32>
    %8 = arith.maximumf %6, %7 : vector<32x128xf32>
    %9 = arith.truncf %8 : vector<32x128xf32> to vector<32x128xbf16>
    %c0_6 = arith.constant 0 : index
    %c0_7 = arith.constant 0 : index
    %10 = vector.load %arg4[%c0_6, %c0_7] : memref<128x128xbf16, #tpu.memory_space<vmem>>, vector<128x128xbf16>
    %cst_8 = arith.constant dense<0.000000e+00> : vector<32x128xf32>
    %11 = tpu.matmul %9, %10, %cst_8 {dimension_numbers = #tpu.dot_dimension_numbers<[1], [0], [0], [1], [0, 0, 1, 1], [], []>} : vector<32x128xbf16>, vector<128x128xbf16>, vector<32x128xf32> -> vector<32x128xf32>
    %c0_9 = arith.constant 0 : index
    %c0_10 = arith.constant 0 : index
    %12 = vector.load %arg5[%c0_9, %c0_10] : memref<1x128xf32, #tpu.memory_space<vmem>>, vector<1x128xf32>
    %13 = vector.broadcast %12 : vector<1x128xf32> to vector<32x128xf32>
    %14 = arith.addf %11, %13 : vector<32x128xf32>
    %cst_11 = arith.constant 0.000000e+00 : f32
    %15 = vector.broadcast %cst_11 : f32 to vector<32x128xf32>
    %16 = arith.maximumf %14, %15 : vector<32x128xf32>
    %17 = arith.truncf %16 : vector<32x128xf32> to vector<32x128xbf16>
    %c0_12 = arith.constant 0 : index
    %c0_13 = arith.constant 0 : index
    %18 = vector.load %arg6[%c0_12, %c0_13] : memref<128x128xbf16, #tpu.memory_space<vmem>>, vector<128x128xbf16>
    %cst_14 = arith.constant dense<0.000000e+00> : vector<32x128xf32>
    %19 = tpu.matmul %17, %18, %cst_14 {dimension_numbers = #tpu.dot_dimension_numbers<[1], [0], [0], [1], [0, 0, 1, 1], [], []>} : vector<32x128xbf16>, vector<128x128xbf16>, vector<32x128xf32> -> vector<32x128xf32>
    %c0_15 = arith.constant 0 : index
    %c0_16 = arith.constant 0 : index
    %20 = vector.load %arg7[%c0_15, %c0_16] : memref<1x128xf32, #tpu.memory_space<vmem>>, vector<1x128xf32>
    %21 = vector.broadcast %20 : vector<1x128xf32> to vector<32x128xf32>
    %22 = arith.addf %19, %21 : vector<32x128xf32>
    %23 = arith.truncf %22 : vector<32x128xf32> to vector<32x128xbf16>
    %c0_17 = arith.constant 0 : index
    %c0_18 = arith.constant 0 : index
    %24 = vector.load %arg8[%c0_17, %c0_18] : memref<32x128xbf16, #tpu.memory_space<vmem>>, vector<32x128xbf16>
    tpu.vector_store %arg8[%c0_17, %c0_18], %23 {strides = array<i32>} : memref<32x128xbf16, #tpu.memory_space<vmem>>, vector<32x128xbf16>,
    return
  }
  func.func @transform_0(%arg0: i32) -> (i32, i32) {
    %c0_i32 = arith.constant 0 : i32
    %c0_i32_0 = arith.constant 0 : i32
    return %arg0, %c0_i32 : i32, i32
  }
  func.func @transform_1(%arg0: i32) -> (i32, i32) {
    %c0_i32 = arith.constant 0 : i32
    %c0_i32_0 = arith.constant 0 : i32
    %c0_i32_1 = arith.constant 0 : i32
    return %c0_i32, %c0_i32_0 : i32, i32
  }
  func.func @transform_2(%arg0: i32) -> (i32, i32) {
    %c0_i32 = arith.constant 0 : i32
    %c0_i32_0 = arith.constant 0 : i32
    %c0_i32_1 = arith.constant 0 : i32
    return %c0_i32, %c0_i32_0 : i32, i32
  }
  func.func @transform_3(%arg0: i32) -> (i32, i32) {
    %c0_i32 = arith.constant 0 : i32
    %c0_i32_0 = arith.constant 0 : i32
    %c0_i32_1 = arith.constant 0 : i32
    return %c0_i32, %c0_i32_0 : i32, i32
  }
  func.func @transform_4(%arg0: i32) -> (i32, i32) {
    %c0_i32 = arith.constant 0 : i32
    %c0_i32_0 = arith.constant 0 : i32
    %c0_i32_1 = arith.constant 0 : i32
    return %c0_i32, %c0_i32_0 : i32, i32
  }
  func.func @transform_5(%arg0: i32) -> (i32, i32) {
    %c0_i32 = arith.constant 0 : i32
    %c0_i32_0 = arith.constant 0 : i32
    %c0_i32_1 = arith.constant 0 : i32
    return %c0_i32, %c0_i32_0 : i32, i32
  }
  func.func @transform_6(%arg0: i32) -> (i32, i32) {
    %c0_i32 = arith.constant 0 : i32
    %c0_i32_0 = arith.constant 0 : i32
    %c0_i32_1 = arith.constant 0 : i32
    return %c0_i32, %c0_i32_0 : i32, i32
  }
  func.func @transform_7(%arg0: i32) -> (i32, i32) {
    %c0_i32 = arith.constant 0 : i32
    %c0_i32_0 = arith.constant 0 : i32
    return %arg0, %c0_i32 : i32, i32
  }
}

</mosaic_0001>

<llo_original>
// kernel: tpu_custom_call.1
$region0: #{tpu_custom_call.1}
  #allocation0 [shape = 'u32[]', space=smem, size = 0x4, offset = 0x4, fixed_abs, tag = 'smem constant byte address 0x4 - core index']
  #allocation1 [shape = 'u32[72,128]{1,0:T(1,128)}', space=vmem, size = 0x9000, scoped, tag = 'internal scratch']
  %s0 = inlined_call_operand.hbm [shape: f32[64,64], index: 0, kind: input, shape index: {}]
  %s1 = inlined_call_operand.hbm [shape: bf16[64,128], index: 1, kind: input, shape index: {}]
  %s2 = inlined_call_operand.vmem [shape: f32[1,128], index: 2, kind: input, shape index: {}]
  %s3 = inlined_call_operand.hbm [shape: bf16[128,128], index: 3, kind: input, shape index: {}]
  %s4 = inlined_call_operand.vmem [shape: f32[1,128], index: 4, kind: input, shape index: {}]
  %s5 = inlined_call_operand.hbm [shape: bf16[128,128], index: 5, kind: input, shape index: {}]
  %s6 = inlined_call_operand.vmem [shape: f32[1,128], index: 6, kind: input, shape index: {}]
  %s7 = inlined_call_operand.hbm [shape: bf16[64,128], index: 7, kind: output, shape index: {}]
  %s8 = sld [smem:[#allocation0]]
  $region77: #{tpu_custom_call.1} parent=0
    _
  %s10 = ssub.s32 1, %s8
  %s11 = scalar_select 0, %s10, %s8
  $region1: #{tpu_custom_call.1} parent=0
    #allocation2 [shape = 'u8[32768]{0}', space=vmem, size = 0x8000, scoped, tag = 'input window, operand 0']
    #allocation3 [shape = 's32[2]{0}', space=sflag, size = 0x8, scoped, tag = 'scoped memory for tpu_custom_call.1']
    #allocation4 [shape = 's32[2]{0}', space=sflag, size = 0x8, scoped, tag = 'scoped memory for tpu_custom_call.1']
    #allocation5 [shape = 'u8[16384]{0}', space=vmem, size = 0x4000, scoped, tag = 'input window, operand 1, single buffered']
    #allocation6 [shape = 's32[1]{0}', space=sflag, size = 0x4, scoped, tag = 'scoped memory for tpu_custom_call.1']
    #allocation7 [shape = 'u8[32768]{0}', space=vmem, size = 0x8000, scoped, tag = 'input window, operand 3, single buffered']
    #allocation8 [shape = 'u8[32768]{0}', space=vmem, size = 0x8000, scoped, tag = 'input window, operand 5, single buffered']
    #allocation9 [shape = 's32[1]{0}', space=sflag, size = 0x4, scoped, tag = 'scoped memory for tpu_custom_call.1']
    #allocation10 [shape = 'u8[16384]{0}', space=vmem, size = 0x4000, scoped, tag = 'output window, operand 0']
    %12 = vsyncpa [#allocation3], 0
    %s13 = scalar_lea.sflag [#allocation3], 1
    %14 = vsyncpa %s13, 0
    %15 = vsyncpa [#allocation6], 0
    %16 = vsyncpa [#allocation9], 0
    %17 = vsyncpa [#allocation4], 0
    %s18 = scalar_lea.sflag [#allocation4], 1
    %19 = vsyncpa %s18, 0
    loop: start=0, step=1, limit=4
    $region2: #{tpu_custom_call.1} parent=1 // loop_pre_header
      _
    $region3: #{tpu_custom_call.1} parent=1 // loop_header
      %s21 = sphi 0, %s25
      %p22 = scmp.ge.s32.totalorder %s21, 4
      %s31 = sphi 0, %s33
      %s34 = sphi 0, %s31
      %s35 = sphi 0, %s34
      %s51 = sphi 0, %s35
      %s55 = sphi 0, %s55
      %s57 = sphi 0, %s55
      %s58 = sphi 0, %s57
      %s72 = sphi 0, %s58
      %s76 = sphi 0, %s76
      %s78 = sphi 0, %s76
      %s79 = sphi 0, %s78
      %s93 = sphi 0, %s79
      %s97 = sphi 0, %s97
      %s99 = sphi 0, %s97
      %s100 = sphi 0, %s99
      %s114 = sphi 0, %s100
      %s118 = sphi 0, %s118
      %s120 = sphi 0, %s118
      %s121 = sphi 0, %s120
      %s135 = sphi 0, %s121
      %s139 = sphi 0, %s139
      %s141 = sphi 0, %s139
      %s142 = sphi 0, %s141
      %s156 = sphi 0, %s142
      %s160 = sphi 0, %s160
      %s162 = sphi 0, %s160
      %s163 = sphi 0, %s162
      %s177 = sphi 0, %s163
      %s183 = sphi 0, %s185
      %s186 = sphi 0, %s183
      %s187 = sphi 0, %s186
      %s203 = sphi 0, %s187
    $region4: #{tpu_custom_call.1} parent=1 // loop_header_branch
      %24 = sbr.rel (%p22) target = $region8
    $region5: #{tpu_custom_call.1} parent=1 // loop_body
      %s26 = ssub.s32 %s21, 1
      %s27 = ssub.s32 %s21, 2
      %s28 = sadd.s32 %s21, 1
      %s29 = ssub.s32 %s21, %s28
      %p30 = scmp.eq.s32.totalorder %s29, 0
      %s32 = sadd.s32 %s31, 1
      %s33 = scalar_select %p30, %s31, %s32
      %p36 = pneg %p30
      %p37 = scmp.eq.s32.totalorder %s21, 1
      %p38 = por %p36, %p37
      %p39 = scmp.ne.s32.totalorder %s31, %s34
      %p40 = scmp.eq.s32.totalorder %s21, 0
      %p41 = por %p39, %p40
      %p42 = scmp.ne.s32.totalorder %s31, %s34
      %p43 = scmp.eq.s32.totalorder %s26, 1
      %p44 = por %p42, %p43
      %p45 = scmp.ne.s32.totalorder %s34, %s35
      %p46 = scmp.eq.s32.totalorder %s26, 0
      %p47 = por %p45, %p46
      %p48 = scmp.ne.s32.totalorder %s34, %s35
      %p49 = scmp.eq.s32.totalorder %s27, 1
      %p50 = por %p48, %p49
      %p52 = scmp.ne.s32.totalorder %s35, %s51
      %p53 = scmp.eq.s32.totalorder %s27, 0
      %p54 = por %p52, %p53
      %s56 = sadd.s32 %s55, 1
      %p59 = scmp.eq.s32.totalorder %s21, 1
      %p60 = scmp.ne.s32.totalorder %s55, %s57
      %p61 = scmp.eq.s32.totalorder %s21, 0
      %p62 = por %p60, %p61
      %p63 = scmp.ne.s32.totalorder %s55, %s57
      %p64 = scmp.eq.s32.totalorder %s26, 1
      %p65 = por %p63, %p64
      %p66 = scmp.ne.s32.totalorder %s57, %s58
      %p67 = scmp.eq.s32.totalorder %s26, 0
      %p68 = por %p66, %p67
      %p69 = scmp.ne.s32.totalorder %s57, %s58
      %p70 = scmp.eq.s32.totalorder %s27, 1
      %p71 = por %p69, %p70
      %p73 = scmp.ne.s32.totalorder %s58, %s72
      %p74 = scmp.eq.s32.totalorder %s27, 0
      %p75 = por %p73, %p74
      %s77 = sadd.s32 %s76, 1
      %p80 = scmp.eq.s32.totalorder %s21, 1
      %p81 = scmp.ne.s32.totalorder %s76, %s78
      %p82 = scmp.eq.s32.totalorder %s21, 0
      %p83 = por %p81, %p82
      %p84 = scmp.ne.s32.totalorder %s76, %s78
      %p85 = scmp.eq.s32.totalorder %s26, 1
      %p86 = por %p84, %p85
      %p87 = scmp.ne.s32.totalorder %s78, %s79
      %p88 = scmp.eq.s32.totalorder %s26, 0
      %p89 = por %p87, %p88
      %p90 = scmp.ne.s32.totalorder %s78, %s79
      %p91 = scmp.eq.s32.totalorder %s27, 1
      %p92 = por %p90, %p91
      %p94 = scmp.ne.s32.totalorder %s79, %s93
      %p95 = scmp.eq.s32.totalorder %s27, 0
      %p96 = por %p94, %p95
      %s98 = sadd.s32 %s97, 1
      %p101 = scmp.eq.s32.totalorder %s21, 1
      %p102 = scmp.ne.s32.totalorder %s97, %s99
      %p103 = scmp.eq.s32.totalorder %s21, 0
      %p104 = por %p102, %p103
      %p105 = scmp.ne.s32.totalorder %s97, %s99
      %p106 = scmp.eq.s32.totalorder %s26, 1
      %p107 = por %p105, %p106
      %p108 = scmp.ne.s32.totalorder %s99, %s100
      %p109 = scmp.eq.s32.totalorder %s26, 0
      %p110 = por %p108, %p109
      %p111 = scmp.ne.s32.totalorder %s99, %s100
      %p112 = scmp.eq.s32.totalorder %s27, 1
      %p113 = por %p111, %p112
      %p115 = scmp.ne.s32.totalorder %s100, %s114
      %p116 = scmp.eq.s32.totalorder %s27, 0
      %p117 = por %p115, %p116
      %s119 = sadd.s32 %s118, 1
      %p122 = scmp.eq.s32.totalorder %s21, 1
      %p123 = scmp.ne.s32.totalorder %s118, %s120
      %p124 = scmp.eq.s32.totalorder %s21, 0
      %p125 = por %p123, %p124
      %p126 = scmp.ne.s32.totalorder %s118, %s120
      %p127 = scmp.eq.s32.totalorder %s26, 1
      %p128 = por %p126, %p127
      %p129 = scmp.ne.s32.totalorder %s120, %s121
      %p130 = scmp.eq.s32.totalorder %s26, 0
      %p131 = por %p129, %p130
      %p132 = scmp.ne.s32.totalorder %s120, %s121
      %p133 = scmp.eq.s32.totalorder %s27, 1
      %p134 = por %p132, %p133
      %p136 = scmp.ne.s32.totalorder %s121, %s135
      %p137 = scmp.eq.s32.totalorder %s27, 0
      %p138 = por %p136, %p137
      %s140 = sadd.s32 %s139, 1
      %p143 = scmp.eq.s32.totalorder %s21, 1
      %p144 = scmp.ne.s32.totalorder %s139, %s141
      %p145 = scmp.eq.s32.totalorder %s21, 0
      %p146 = por %p144, %p145
      %p147 = scmp.ne.s32.totalorder %s139, %s141
      %p148 = scmp.eq.s32.totalorder %s26, 1
      %p149 = por %p147, %p148
      %p150 = scmp.ne.s32.totalorder %s141, %s142
      %p151 = scmp.eq.s32.totalorder %s26, 0
      %p152 = por %p150, %p151
      %p153 = scmp.ne.s32.totalorder %s141, %s142
      %p154 = scmp.eq.s32.totalorder %s27, 1
      %p155 = por %p153, %p154
      %p157 = scmp.ne.s32.totalorder %s142, %s156
      %p158 = scmp.eq.s32.totalorder %s27, 0
      %p159 = por %p157, %p158
      %s161 = sadd.s32 %s160, 1
      %p164 = scmp.eq.s32.totalorder %s21, 1
      %p165 = scmp.ne.s32.totalorder %s160, %s162
      %p166 = scmp.eq.s32.totalorder %s21, 0
      %p167 = por %p165, %p166
      %p168 = scmp.ne.s32.totalorder %s160, %s162
      %p169 = scmp.eq.s32.totalorder %s26, 1
      %p170 = por %p168, %p169
      %p171 = scmp.ne.s32.totalorder %s162, %s163
      %p172 = scmp.eq.s32.totalorder %s26, 0
      %p173 = por %p171, %p172
      %p174 = scmp.ne.s32.totalorder %s162, %s163
      %p175 = scmp.eq.s32.totalorder %s27, 1
      %p176 = por %p174, %p175
      %p178 = scmp.ne.s32.totalorder %s163, %s177
      %p179 = scmp.eq.s32.totalorder %s27, 0
      %p180 = por %p178, %p179
      %s181 = ssub.s32 %s21, %s28
      %p182 = scmp.eq.s32.totalorder %s181, 0
      %s184 = sadd.s32 %s183, 1
      %s185 = scalar_select %p182, %s183, %s184
      %p188 = pneg %p182
      %p189 = scmp.eq.s32.totalorder %s21, 1
      %p190 = por %p188, %p189
      %p191 = scmp.ne.s32.totalorder %s183, %s186
      %p192 = scmp.eq.s32.totalorder %s21, 0
      %p193 = por %p191, %p192
      %p194 = scmp.ne.s32.totalorder %s183, %s186
      %p195 = scmp.eq.s32.totalorder %s26, 1
      %p196 = por %p194, %p195
      %p197 = scmp.ne.s32.totalorder %s186, %s187
      %p198 = scmp.eq.s32.totalorder %s26, 0
      %p199 = por %p197, %p198
      %p200 = scmp.ne.s32.totalorder %s186, %s187
      %p201 = scmp.eq.s32.totalorder %s27, 1
      %p202 = por %p200, %p201
      %p204 = scmp.ne.s32.totalorder %s187, %s203
      %p205 = scmp.eq.s32.totalorder %s27, 0
      %p206 = por %p204, %p205
      %p207 = scmp.le.s32.totalorder 1, %s21
      %p208 = scmp.lt.s32.totalorder %s21, 3
      %p209 = pnand %p207, %p208
      %p210 = pneg %p209
      // Predicated region
      $region9: #{tpu_custom_call.1} parent=5 // pred_check
        _
      $region10: #{tpu_custom_call.1} parent=5 // pred_check_branch
        %212 = sbr.rel (%p209) target = $region12
      $region11: #{tpu_custom_call.1} parent=5 // pred_region
        %s213 = ssub.s32 %s21, 1
        // Predicated region
        $region13: #{tpu_custom_call.1} parent=11 // pred_check
          %p214 = pneg %p68
        $region14: #{tpu_custom_call.1} parent=11 // pred_check_branch
          %216 = sbr.rel (%p214) target = $region16
        $region15: #{tpu_custom_call.1} parent=11 // pred_region
          %218 = vsyncadd [#allocation6], 0
          %s219 = sshll.u32 %s1, 4
          %s220 = int_to_ptr.hbm [resolvable:$true] %s219
          %s221 = sshll.u32 [#allocation5], 4
          %s222 = int_to_ptr.vmem [resolvable:$true] %s221
          %227 = dma.hbm_to_vmem [thread:$0]  %s220, 512, %s222, [#allocation6], 64, 64, 4
        $region16: #{tpu_custom_call.1} parent=11 // pred_fallthru
          _
        // Predicated region
        $region17: #{tpu_custom_call.1} parent=11 // pred_check
          %p228 = pneg %p89
        $region18: #{tpu_custom_call.1} parent=11 // pred_check_branch
          %230 = sbr.rel (%p228) target = $region20
        $region19: #{tpu_custom_call.1} parent=11 // pred_region
          _
        $region20: #{tpu_custom_call.1} parent=11 // pred_fallthru
          _
        // Predicated region
        $region21: #{tpu_custom_call.1} parent=11 // pred_check
          %p231 = pneg %p110
        $region22: #{tpu_custom_call.1} parent=11 // pred_check_branch
          %233 = sbr.rel (%p231) target = $region24
        $region23: #{tpu_custom_call.1} parent=11 // pred_region
          %235 = vsyncadd [#allocation6], 0
          %s236 = sshll.u32 %s3, 4
          %s237 = int_to_ptr.hbm [resolvable:$true] %s236
          %s238 = sshll.u32 [#allocation7], 4
          %s239 = int_to_ptr.vmem [resolvable:$true] %s238
          %244 = dma.hbm_to_vmem [thread:$0]  %s237, 1024, %s239, [#allocation6], 64, 64, 4
        $region24: #{tpu_custom_call.1} parent=11 // pred_fallthru
          _
        // Predicated region
        $region25: #{tpu_custom_call.1} parent=11 // pred_check
          %p245 = pneg %p131
        $region26: #{tpu_custom_call.1} parent=11 // pred_check_branch
          %247 = sbr.rel (%p245) target = $region28
        $region27: #{tpu_custom_call.1} parent=11 // pred_region
          _
        $region28: #{tpu_custom_call.1} parent=11 // pred_fallthru
          _
        // Predicated region
        $region29: #{tpu_custom_call.1} parent=11 // pred_check
          %p248 = pneg %p152
        $region30: #{tpu_custom_call.1} parent=11 // pred_check_branch
          %250 = sbr.rel (%p248) target = $region32
        $region31: #{tpu_custom_call.1} parent=11 // pred_region
          %252 = vsyncadd [#allocation9], 0
          %s253 = sshll.u32 %s5, 4
          %s254 = int_to_ptr.hbm [resolvable:$true] %s253
          %s255 = sshll.u32 [#allocation8], 4
          %s256 = int_to_ptr.vmem [resolvable:$true] %s255
          %261 = dma.hbm_to_vmem [thread:$0]  %s254, 1024, %s256, [#allocation9], 64, 64, 4
        $region32: #{tpu_custom_call.1} parent=11 // pred_fallthru
          _
        // Predicated region
        $region33: #{tpu_custom_call.1} parent=11 // pred_check
          %p262 = pneg %p173
        $region34: #{tpu_custom_call.1} parent=11 // pred_check_branch
          %264 = sbr.rel (%p262) target = $region36
        $region35: #{tpu_custom_call.1} parent=11 // pred_region
          _
        $region36: #{tpu_custom_call.1} parent=11 // pred_fallthru
          _
      $region12: #{tpu_custom_call.1} parent=5 // pred_fallthru
        _
      %p265 = scmp.lt.s32.totalorder %s21, 2
      // Predicated region
      $region37: #{tpu_custom_call.1} parent=5 // pred_check
        %p266 = pneg %p265
      $region38: #{tpu_custom_call.1} parent=5 // pred_check_branch
        %268 = sbr.rel (%p266) target = $region40
      $region39: #{tpu_custom_call.1} parent=5 // pred_region
        // Predicated region
        $region41: #{tpu_custom_call.1} parent=39 // pred_check
          %p269 = pneg %p41
        $region42: #{tpu_custom_call.1} parent=39 // pred_check_branch
          %271 = sbr.rel (%p269) target = $region44
        $region43: #{tpu_custom_call.1} parent=39 // pred_region
          %s272 = sand.u32 %s31, 1
          %s273 = scalar_lea.sflag [#allocation3], %s272
          %s274 = sand.u32 %s31, 1
          %s275 = smul.addr %s274, 32
          %s276 = scalar_lea.vmem [#allocation2], %s275
          %s277 = smul.u32 4, %s21
          %279 = vsyncadd %s273, 0
          %s280 = smul.addr %s277, 8
          %s281 = scalar_lea.hbm %s0, %s280
          %s282 = sshll.u32 %s281, 4
          %s283 = int_to_ptr.hbm [resolvable:$true] %s282
          %s284 = sshll.u32 %s276, 4
          %s285 = int_to_ptr.vmem [resolvable:$true] %s284
          %290 = dma.hbm_to_vmem [thread:$0]  %s283, 512, %s285, %s273, 128, 128, 8
        $region44: #{tpu_custom_call.1} parent=39 // pred_fallthru
          _
      $region40: #{tpu_custom_call.1} parent=5 // pred_fallthru
        _
      %p291 = scmp.le.s32.totalorder 1, %s21
      %p292 = scmp.lt.s32.totalorder %s21, 3
      %p293 = pnand %p291, %p292
      %p294 = pneg %p293
      // Predicated region
      $region45: #{tpu_custom_call.1} parent=5 // pred_check
        _
      $region46: #{tpu_custom_call.1} parent=5 // pred_check_branch
        %296 = sbr.rel (%p293) target = $region48
      $region47: #{tpu_custom_call.1} parent=5 // pred_region
        %s297 = ssub.s32 %s21, 1
        %s298 = sand.u32 %s34, 1
        %s299 = scalar_lea.sflag [#allocation3], %s298
        %s300 = sand.u32 %s34, 1
        %s301 = smul.addr %s300, 32
        %s302 = scalar_lea.vmem [#allocation2], %s301
        // Predicated region
        $region49: #{tpu_custom_call.1} parent=47 // pred_check
          %p303 = pneg %p47
        $region50: #{tpu_custom_call.1} parent=47 // pred_check_branch
          %305 = sbr.rel (%p303) target = $region52
        $region51: #{tpu_custom_call.1} parent=47 // pred_region
          %307 = dma.done %s299, 512
        $region52: #{tpu_custom_call.1} parent=47 // pred_fallthru
          _
        // Predicated region
        $region53: #{tpu_custom_call.1} parent=47 // pred_check
          %p308 = pneg %p68
        $region54: #{tpu_custom_call.1} parent=47 // pred_check_branch
          %310 = sbr.rel (%p308) target = $region56
        $region55: #{tpu_custom_call.1} parent=47 // pred_region
          %312 = dma.done [#allocation6], 512
        $region56: #{tpu_custom_call.1} parent=47 // pred_fallthru
          _
        // Predicated region
        $region57: #{tpu_custom_call.1} parent=47 // pred_check
          %p313 = pneg %p110
        $region58: #{tpu_custom_call.1} parent=47 // pred_check_branch
          %315 = sbr.rel (%p313) target = $region60
        $region59: #{tpu_custom_call.1} parent=47 // pred_region
          %317 = dma.done [#allocation6], 1024
        $region60: #{tpu_custom_call.1} parent=47 // pred_fallthru
          _
        // Predicated region
        $region61: #{tpu_custom_call.1} parent=47 // pred_check
          %p318 = pneg %p152
        $region62: #{tpu_custom_call.1} parent=47 // pred_check_branch
          %320 = sbr.rel (%p318) target = $region64
        $region63: #{tpu_custom_call.1} parent=47 // pred_region
          %322 = dma.done [#allocation9], 1024
        $region64: #{tpu_custom_call.1} parent=47 // pred_fallthru
          _
        %s323 = sand.u32 %s34, 1
        %s324 = scalar_lea.sflag [#allocation3], %s323
        %s325 = sand.u32 %s34, 1
        %s326 = smul.addr %s325, 32
        %s327 = scalar_lea.vmem [#allocation2], %s326
        %p328 = pneg %p47
        %p329 = pneg %p44
        %p330 = pneg %p68
        %p331 = pneg %p65
        %p332 = pneg %p89
        %p333 = pneg %p86
        %p334 = pneg %p110
        %p335 = pneg %p107
        %p336 = pneg %p131
        %p337 = pneg %p128
        %p338 = pneg %p152
        %p339 = pneg %p149
        %p340 = pneg %p173
        %p341 = pneg %p170
        %p342 = pneg %p199
        %p343 = pneg %p196
        %s344 = sand.u32 %s186, 1
        %s345 = scalar_lea.sflag [#allocation4], %s344
        %s346 = sand.u32 %s186, 1
        %s347 = smul.addr %s346, 16
        %s348 = scalar_lea.vmem [#allocation10], %s347
        %s349 = smul.u32 4, %s26
        %s350 = smul.u32 4, %s26
        %v352 = vld [vmem:[%s302] sm:$0xff]
        %v353 = vld [vmem:[%s302 + $0x8] sm:$0xff]
        %v354 = vld [vmem:[%s302 + $0x10] sm:$0xff]
        %v355 = vld [vmem:[%s302 + $0x18] sm:$0xff]
        %v356 = vpack.c.bf16 %v353, %v352
        %v357 = vpack.c.bf16 %v355, %v354
        %v358 = vld [vmem:[#allocation5] sm:$0xf]
        %v359 = vld [vmem:[#allocation5 + $0x4] sm:$0xf]
        %v360 = vld [vmem:[#allocation5 + $0x8] sm:$0xf]
        %v361 = vld [vmem:[#allocation5 + $0xc] sm:$0xf]
        %v362 = vld [vmem:[#allocation5 + $0x10] sm:$0xf]
        %v363 = vld [vmem:[#allocation5 + $0x14] sm:$0xf]
        %v364 = vld [vmem:[#allocation5 + $0x18] sm:$0xf]
        %v365 = vld [vmem:[#allocation5 + $0x1c] sm:$0xf]
        %v366 = vld [vmem:[%s2] sm:$0x1]
        %v368 = vperm.slane %v366, 0
        %v378 = vunpack.c.l.b16 %v358
        %v379 = vunpack.c.l.b16 %v359
        %v380 = vunpack.c.l.b16 %v360
        %v381 = vunpack.c.l.b16 %v361
        %v382 = vunpack.c.l.b16 %v362
        %v383 = vunpack.c.l.b16 %v363
        %v384 = vunpack.c.l.b16 %v364
        %v385 = vunpack.c.l.b16 %v365
        %v386 = vpack.c.b16 %v379, %v378
        %v387 = vpack.c.b16 %v381, %v380
        %v388 = vpack.c.b16 %v383, %v382
        %v389 = vpack.c.b16 %v385, %v384
        %vm394 = vcmask 523264
        %v396 = vsel %vm394, %v356, 0
        %v399 = vsel %vm394, %v357, 0
        %401 = vmatpush.bf16.msra.mxu0 0
        %402 = vmatpush.bf16.msra.mxu0 0
        %403 = vmatpush.bf16.msra.mxu0 0
        %404 = vmatpush.bf16.msra.mxu0 0
        %405 = vmatpush.bf16.msra.mxu0 %v389
        %406 = vmatpush.bf16.msra.mxu0 %v388
        %407 = vmatpush.bf16.msra.mxu0 %v387
        %408 = vmatpush.bf16.msra.mxu0 %v386
        %409 = vmatmul.bf16.gmra.mxu0 %v396
        %v410 = vpop.f32.mrf.mxu0
        %v411 = vadd.f32 %v368, %v410
        %v412 = vpop.f32.mrf.mxu0
        %v413 = vadd.f32 %v368, %v412
        %414 = vmatmul.bf16.gmra.mxu0 %v399
        %v415 = vpop.f32.mrf.mxu0
        %v416 = vadd.f32 %v368, %v415
        %v417 = vpop.f32.mrf.mxu0
        %v418 = vadd.f32 %v368, %v417
        %419 = vdwg.mxu0
        %v420 = vmax.f32 %v411, 0.0
        %v421 = vmax.f32 %v413, 0.0
        %v422 = vmax.f32 %v416, 0.0
        %v423 = vmax.f32 %v418, 0.0
        %v424 = vpack.c.bf16 %v421, %v420
        %v425 = vpack.c.bf16 %v423, %v422
        %v426 = vld [vmem:[#allocation7] sm:$0xf]
        %v427 = vld [vmem:[#allocation7 + $0x4] sm:$0xf]
        %v428 = vld [vmem:[#allocation7 + $0x8] sm:$0xf]
        %v429 = vld [vmem:[#allocation7 + $0xc] sm:$0xf]
        %v430 = vld [vmem:[#allocation7 + $0x10] sm:$0xf]
        %v431 = vld [vmem:[#allocation7 + $0x14] sm:$0xf]
        %v432 = vld [vmem:[#allocation7 + $0x18] sm:$0xf]
        %v433 = vld [vmem:[#allocation7 + $0x1c] sm:$0xf]
        %v434 = vld [vmem:[#allocation7 + $0x20] sm:$0xf]
        %v435 = vld [vmem:[#allocation7 + $0x24] sm:$0xf]
        %v436 = vld [vmem:[#allocation7 + $0x28] sm:$0xf]
        %v437 = vld [vmem:[#allocation7 + $0x2c] sm:$0xf]
        %v438 = vld [vmem:[#allocation7 + $0x30] sm:$0xf]
        %v439 = vld [vmem:[#allocation7 + $0x34] sm:$0xf]
        %v440 = vld [vmem:[#allocation7 + $0x38] sm:$0xf]
        %v441 = vld [vmem:[#allocation7 + $0x3c] sm:$0xf]
        %v442 = vld [vmem:[%s4] sm:$0x1]
        %v444 = vperm.slane %v442, 0
        %v462 = vunpack.c.l.b16 %v426
        %v463 = vunpack.c.l.b16 %v427
        %v464 = vunpack.c.l.b16 %v428
        %v465 = vunpack.c.l.b16 %v429
        %v466 = vunpack.c.l.b16 %v430
        %v467 = vunpack.c.l.b16 %v431
        %v468 = vunpack.c.l.b16 %v432
        %v469 = vunpack.c.l.b16 %v433
        %v470 = vunpack.c.l.b16 %v434
        %v471 = vunpack.c.l.b16 %v435
        %v472 = vunpack.c.l.b16 %v436
        %v473 = vunpack.c.l.b16 %v437
        %v474 = vunpack.c.l.b16 %v438
        %v475 = vunpack.c.l.b16 %v439
        %v476 = vunpack.c.l.b16 %v440
        %v477 = vunpack.c.l.b16 %v441
        %v478 = vpack.c.b16 %v463, %v462
        %v479 = vpack.c.b16 %v465, %v464
        %v480 = vpack.c.b16 %v467, %v466
        %v481 = vpack.c.b16 %v469, %v468
        %v482 = vpack.c.b16 %v471, %v470
        %v483 = vpack.c.b16 %v473, %v472
        %v484 = vpack.c.b16 %v475, %v474
        %v485 = vpack.c.b16 %v477, %v476
        %494 = vmatpush.bf16.msra.mxu0 %v485
        %495 = vmatpush.bf16.msra.mxu0 %v484
        %496 = vmatpush.bf16.msra.mxu0 %v483
        %497 = vmatpush.bf16.msra.mxu0 %v482
        %498 = vmatpush.bf16.msra.mxu0 %v481
        %499 = vmatpush.bf16.msra.mxu0 %v480
        %500 = vmatpush.bf16.msra.mxu0 %v479
        %501 = vmatpush.bf16.msra.mxu0 %v478
        %502 = vmatmul.bf16.gmra.mxu0 %v424
        %v503 = vpop.f32.mrf.mxu0
        %v504 = vadd.f32 %v444, %v503
        %v505 = vpop.f32.mrf.mxu0
        %v506 = vadd.f32 %v444, %v505
        %507 = vmatmul.bf16.gmra.mxu0 %v425
        %v508 = vpop.f32.mrf.mxu0
        %v509 = vadd.f32 %v444, %v508
        %v510 = vpop.f32.mrf.mxu0
        %v511 = vadd.f32 %v444, %v510
        %512 = vdwg.mxu0
        %v513 = vmax.f32 %v504, 0.0
        %v514 = vmax.f32 %v506, 0.0
        %v515 = vmax.f32 %v509, 0.0
        %v516 = vmax.f32 %v511, 0.0
        %v517 = vpack.c.bf16 %v514, %v513
        %v518 = vpack.c.bf16 %v516, %v515
        %v519 = vld [vmem:[#allocation8] sm:$0xf]
        %v520 = vld [vmem:[#allocation8 + $0x4] sm:$0xf]
        %v521 = vld [vmem:[#allocation8 + $0x8] sm:$0xf]
        %v522 = vld [vmem:[#allocation8 + $0xc] sm:$0xf]
        %v523 = vld [vmem:[#allocation8 + $0x10] sm:$0xf]
        %v524 = vld [vmem:[#allocation8 + $0x14] sm:$0xf]
        %v525 = vld [vmem:[#allocation8 + $0x18] sm:$0xf]
        %v526 = vld [vmem:[#allocation8 + $0x1c] sm:$0xf]
        %v527 = vld [vmem:[#allocation8 + $0x20] sm:$0xf]
        %v528 = vld [vmem:[#allocation8 + $0x24] sm:$0xf]
        %v529 = vld [vmem:[#allocation8 + $0x28] sm:$0xf]
        %v530 = vld [vmem:[#allocation8 + $0x2c] sm:$0xf]
        %v531 = vld [vmem:[#allocation8 + $0x30] sm:$0xf]
        %v532 = vld [vmem:[#allocation8 + $0x34] sm:$0xf]
        %v533 = vld [vmem:[#allocation8 + $0x38] sm:$0xf]
        %v534 = vld [vmem:[#allocation8 + $0x3c] sm:$0xf]
        %v535 = vld [vmem:[%s6] sm:$0x1]
        %v537 = vperm.slane %v535, 0
        %v555 = vunpack.c.l.b16 %v519
        %v556 = vunpack.c.l.b16 %v520
        %v557 = vunpack.c.l.b16 %v521
        %v558 = vunpack.c.l.b16 %v522
        %v559 = vunpack.c.l.b16 %v523
        %v560 = vunpack.c.l.b16 %v524
        %v561 = vunpack.c.l.b16 %v525
        %v562 = vunpack.c.l.b16 %v526
        %v563 = vunpack.c.l.b16 %v527
        %v564 = vunpack.c.l.b16 %v528
        %v565 = vunpack.c.l.b16 %v529
        %v566 = vunpack.c.l.b16 %v530
        %v567 = vunpack.c.l.b16 %v531
        %v568 = vunpack.c.l.b16 %v532
        %v569 = vunpack.c.l.b16 %v533
        %v570 = vunpack.c.l.b16 %v534
        %v571 = vpack.c.b16 %v556, %v555
        %v572 = vpack.c.b16 %v558, %v557
        %v573 = vpack.c.b16 %v560, %v559
        %v574 = vpack.c.b16 %v562, %v561
        %v575 = vpack.c.b16 %v564, %v563
        %v576 = vpack.c.b16 %v566, %v565
        %v577 = vpack.c.b16 %v568, %v567
        %v578 = vpack.c.b16 %v570, %v569
        %587 = vmatpush.bf16.msra.mxu0 %v578
        %588 = vmatpush.bf16.msra.mxu0 %v577
        %589 = vmatpush.bf16.msra.mxu0 %v576
        %590 = vmatpush.bf16.msra.mxu0 %v575
        %591 = vmatpush.bf16.msra.mxu0 %v574
        %592 = vmatpush.bf16.msra.mxu0 %v573
        %593 = vmatpush.bf16.msra.mxu0 %v572
        %594 = vmatpush.bf16.msra.mxu0 %v571
        %595 = vmatmul.bf16.gmra.mxu0 %v517
        %v596 = vpop.f32.mrf.mxu0
        %v597 = vadd.f32 %v537, %v596
        %v598 = vpop.f32.mrf.mxu0
        %v599 = vadd.f32 %v537, %v598
        %600 = vmatmul.bf16.gmra.mxu0 %v518
        %v601 = vpop.f32.mrf.mxu0
        %v602 = vadd.f32 %v537, %v601
        %v603 = vpop.f32.mrf.mxu0
        %v604 = vadd.f32 %v537, %v603
        %605 = vdwg.mxu0
        %v606 = vpack.c.bf16 %v597, %v597
        %v607 = vpack.c.bf16 %v599, %v599
        %v608 = vpack.c.bf16 %v602, %v602
        %v609 = vpack.c.bf16 %v604, %v604
        %610 = vst [vmem:[%s348] sm:$0xf] %v606
        %611 = vst [vmem:[%s348 + $0x4] sm:$0xf] %v607
        %612 = vst [vmem:[%s348 + $0x8] sm:$0xf] %v608
        %613 = vst [vmem:[%s348 + $0xc] sm:$0xf] %v609
        %s614 = sand.u32 %s186, 1
        %s615 = scalar_lea.sflag [#allocation4], %s614
        %s616 = sand.u32 %s186, 1
        %s617 = smul.addr %s616, 16
        %s618 = scalar_lea.vmem [#allocation10], %s617
        // Predicated region
        $region65: #{tpu_custom_call.1} parent=47 // pred_check
          %p619 = pneg %p196
        $region66: #{tpu_custom_call.1} parent=47 // pred_check_branch
          %621 = sbr.rel (%p619) target = $region68
        $region67: #{tpu_custom_call.1} parent=47 // pred_region
          %s622 = smul.u32 4, %s26
          %624 = vsyncadd %s615, 0
          %s625 = smul.addr %s622, 4
          %s626 = scalar_lea.hbm %s7, %s625
          %s627 = sshll.u32 %s618, 4
          %s628 = int_to_ptr.vmem [resolvable:$true] %s627
          %s629 = sshll.u32 %s626, 4
          %s630 = int_to_ptr.hbm [resolvable:$true] %s629
          %635 = dma.vmem_to_hbm [thread:$0]  %s628, 256, %s630, %s615, 64, 64, 4
        $region68: #{tpu_custom_call.1} parent=47 // pred_fallthru
          _
      $region48: #{tpu_custom_call.1} parent=5 // pred_fallthru
        _
      %p636 = scmp.le.s32.totalorder 2, %s21
      // Predicated region
      $region69: #{tpu_custom_call.1} parent=5 // pred_check
        %p637 = pneg %p636
      $region70: #{tpu_custom_call.1} parent=5 // pred_check_branch
        %639 = sbr.rel (%p637) target = $region72
      $region71: #{tpu_custom_call.1} parent=5 // pred_region
        %s640 = ssub.s32 %s21, 2
        // Predicated region
        $region73: #{tpu_custom_call.1} parent=71 // pred_check
          %p641 = pneg %p202
        $region74: #{tpu_custom_call.1} parent=71 // pred_check_branch
          %643 = sbr.rel (%p641) target = $region76
        $region75: #{tpu_custom_call.1} parent=71 // pred_region
          %s644 = sand.u32 %s187, 1
          %s645 = scalar_lea.sflag [#allocation4], %s644
          %s646 = sand.u32 %s187, 1
          %s647 = smul.addr %s646, 16
          %s648 = scalar_lea.vmem [#allocation10], %s647
          %650 = dma.done %s645, 256
        $region76: #{tpu_custom_call.1} parent=71 // pred_fallthru
          _
      $region72: #{tpu_custom_call.1} parent=5 // pred_fallthru
        _
    $region6: #{tpu_custom_call.1} parent=1 // loop_footer
      %s25 = sadd.s32 1, %s21
    $region7: #{tpu_custom_call.1} parent=1 // loop_footer_branch
      %20 = sbr.rel target = $region3
    $region8: #{tpu_custom_call.1} parent=1 // loop_exit
      _
    %651 = vsyncpa [#allocation3], 1
    %s652 = scalar_lea.sflag [#allocation3], 1
    %653 = vsyncpa %s652, 1
    %654 = vsyncpa [#allocation6], 1
    %655 = vsyncpa [#allocation9], 1
    %656 = vsyncpa [#allocation4], 1
    %s657 = scalar_lea.sflag [#allocation4], 1
    %658 = vsyncpa %s657, 1

</llo_original>
